<compile_context>
chip_gen: v6e
topology: v6e:2x2x1
jax: 0.10.0
libtpu: 0.0.40
codegen_flags: <defaults>
</compile_context>

<pallas_src>
import functools

import jax
import jax.numpy as jnp
from jax.experimental import pallas as pl
from jax.experimental.pallas import tpu as pltpu


# --------------------------------------------------------------------------- #
# Kernel
# --------------------------------------------------------------------------- #
def _softmax_t_kernel(y_ref, o_ref, *, inv_T, fold_scale):
    if fold_scale:
        # T > 0: max(y / T) == max(y) / T, so take the row max on the raw logits
        # and fold 1/T into the exp argument. Saves one full-tile f32 temporary.
        y = y_ref[...]
        m = jnp.max(y, axis=-1, keepdims=True)
        e = jnp.exp((y.astype(jnp.float32) - m.astype(jnp.float32)) * inv_T)
    else:
        # Fallback (T <= 0): scale first, then the usual stable softmax.
        x = y_ref[...].astype(jnp.float32) * inv_T
        m = jnp.max(x, axis=-1, keepdims=True)
        e = jnp.exp(x - m)
    s = jnp.sum(e, axis=-1, keepdims=True)
    # Exact per-row reciprocal (one divide per row): rows sum to 1 up to f32
    # rounding.  (approx vrcp was removed — see header note.)
    o_ref[...] = (e * (1.0 / s)).astype(o_ref.dtype)


# --------------------------------------------------------------------------- #
# Block-sizing helpers
# --------------------------------------------------------------------------- #
def _round_up(x: int, m: int) -> int:
    return ((x + m - 1) // m) * m


def _sublane_multiple(dtype) -> int:
    # Rows per packed sublane group: 8 for 4-byte, 16 for 2-byte, 32 for 1-byte.
    itemsize = max(jnp.dtype(dtype).itemsize, 1)
    return 8 * max(1, 4 // itemsize)


def _vmem_capacity_bytes() -> int:
    try:
        return int(pltpu.get_tpu_info().vmem_capacity_bytes)
    except Exception:
        return 64 << 20  # conservative default (v7x per-TC VMEM)


def _choose_block_rows(B: int, C: int, in_dtype, out_dtype, *,
                       vmem_limit_bytes: int,
                       target_io_bytes: int = 8 << 20,
                       min_io_bytes: int = 4 << 20) -> int:
    """Row tile sized so each grid step moves ~target_io_bytes of HBM traffic,
    while the double-buffered blocks + in-kernel f32 temps stay well inside the
    scoped VMEM limit."""
    in_sz = jnp.dtype(in_dtype).itemsize
    out_sz = jnp.dtype(out_dtype).itemsize
    mult = max(_sublane_multiple(in_dtype), _sublane_multiple(out_dtype))

    io_per_row = (in_sz + out_sz) * C                 # HBM bytes per row per step
    # VMEM per row: double-buffered in + out blocks plus ~2 full-tile f32
    # intermediates (upcast + exp) of the in-kernel working set.
    vmem_per_row = 2 * io_per_row + 2 * 4 * C
    budget = max(vmem_limit_bytes // 2, 1 << 20)      # leave 2x headroom

    rows_vmem = max(budget // vmem_per_row, 1)
    rows_io = max(target_io_bytes // io_per_row, 1)
    rows = min(rows_vmem, rows_io)
    rows = max((rows // mult) * mult, mult)
    # Never over-cover the batch by more than sublane padding.
    rows = min(rows, _round_up(B, mult))

    # Prefer an even step count (v7x shards the 'parallel' axis across 2 TCs),
    # but never shrink a step below the minimum-bytes target.
    n = pl.cdiv(B, rows)
    if n > 1 and n % 2 == 1:
        cand = _round_up(pl.cdiv(B, n + 1), mult)
        if cand >= mult and cand * io_per_row >= min_io_bytes:
            rows = cand
    return rows


# --------------------------------------------------------------------------- #
# Public wrapper
# --------------------------------------------------------------------------- #
def _softmax_t_2d(y: jax.Array, T: float, *, block_rows=None, out_dtype=None):
    B, C = y.shape
    out_dtype = y.dtype if out_dtype is None else jnp.dtype(out_dtype)

    cap = _vmem_capacity_bytes()
    vmem_limit = int(min((cap * 3) // 4, 96 << 20))   # 48 MiB on v7x, 96 MiB on v5e/v6e

    mult = max(_sublane_multiple(y.dtype), _sublane_multiple(out_dtype))
    if block_rows is None:
        block_rows = _choose_block_rows(B, C, y.dtype, out_dtype,
                                        vmem_limit_bytes=vmem_limit)
    block_rows = _round_up(max(int(block_rows), 1), mult)

    fold_scale = float(T) > 0.0
    kernel = functools.partial(_softmax_t_kernel,
                               inv_T=float(1.0 / float(T)),
                               fold_scale=fold_scale)

    return pl.pallas_call(
        kernel,
        out_shape=jax.ShapeDtypeStruct((B, C), out_dtype),
        grid=(pl.cdiv(B, block_rows),),
        in_specs=[pl.BlockSpec((block_rows, C), lambda i: (i, 0))],
        out_specs=pl.BlockSpec((block_rows, C), lambda i: (i, 0)),
        compiler_params=pltpu.CompilerParams(
            dimension_semantics=("parallel",),
            vmem_limit_bytes=vmem_limit,
        ),
    )(y)


def softmax_t(y: jax.Array, T: float, *, block_rows=None, out_dtype=None):
    """Pallas TPU implementation of Softmax_T.forward: softmax(y / T, dim=1)."""
    if y.ndim == 2:
        return _softmax_t_2d(y, T, block_rows=block_rows, out_dtype=out_dtype)
    # General N-D input: softmax over dim 1 — move the class axis last,
    # flatten to 2D, run the kernel, and undo (wrapper-side layout plumbing).
    ym = jnp.moveaxis(y, 1, -1)
    shp = ym.shape
    out2d = _softmax_t_2d(ym.reshape(-1, shp[-1]), T,
                          block_rows=block_rows, out_dtype=out_dtype)
    return jnp.moveaxis(out2d.reshape(shp), -1, 1)


def softmax_t_ref(y: jax.Array, T: float) -> jax.Array:
    # Pure-JAX reference (matches F.softmax(y / T, dim=1)).
    return jax.nn.softmax(y.astype(jnp.float32) / T, axis=1).astype(y.dtype)


# --------------------------------------------------------------------------- #
# Self-test
# --------------------------------------------------------------------------- #
if __name__ == "__main__":
    key = jax.random.PRNGKey(0)
    T = 4.0  # distillation temperature
    k1, k2, k3 = jax.random.split(key, 3)

    # Case 1: small KD classification logits (batch=8, classes=32).
    y1 = jax.random.normal(k1, (8, 32), dtype=jnp.float32)
    out1 = jax.block_until_ready(softmax_t(y1, T))
    ref1 = softmax_t_ref(y1, T)
    assert out1.shape == y1.shape
    assert jnp.allclose(out1, ref1, atol=2e-3, rtol=2e-3), "case 1 mismatch"
    assert jnp.allclose(jnp.sum(out1, axis=1), 1.0, atol=2e-3), "case 1 rows != 1"

    # Case 2: batch not divisible by the row tile (exercises the masked tail
    # block) and multiple grid steps; force a small tile to hit the tail path.
    y2 = jax.random.normal(k2, (20, 160), dtype=jnp.float32)
    out2 = jax.block_until_ready(softmax_t(y2, T, block_rows=8))
    ref2 = softmax_t_ref(y2, T)
    assert out2.shape == y2.shape
    assert jnp.allclose(out2, ref2, atol=2e-3, rtol=2e-3), "case 2 mismatch"
    assert jnp.allclose(jnp.sum(out2, axis=1), 1.0, atol=2e-3), "case 2 rows != 1"

    # Case 3: bf16 logits — bf16 in / bf16 out, 16-row sublane packing multiple.
    y3 = (jax.random.normal(k3, (24, 256), dtype=jnp.float32) * 3.0).astype(jnp.bfloat16)
    out3 = jax.block_until_ready(softmax_t(y3, T))
    ref3 = softmax_t_ref(y3, T)
    assert out3.shape == y3.shape and out3.dtype == jnp.bfloat16
    assert jnp.allclose(out3.astype(jnp.float32), ref3.astype(jnp.float32),
                        atol=1e-2, rtol=1e-2), "case 3 mismatch"

    print("KERNEL_OK")
</pallas_src>

<mosaic_0001>
module attributes {stable_mosaic.version = 11 : i64} {
  func.func @_softmax_t_kernel(%arg0: i32, %arg1: memref<8x32xf32, #tpu.memory_space<vmem>>, %arg2: memref<8x32xf32, #tpu.memory_space<vmem>>) attributes {dimension_semantics = [#tpu.dimension_semantics<parallel>], iteration_bounds = array<i64: 1>, scalar_prefetch = 0 : i64, scratch_operands = 0 : i64, tpu.core_type = #tpu.core_type<tc>, window_params = [{transform_indices = @transform_0, window_bounds = array<i64: 8, 32>}, {transform_indices = @transform_1, window_bounds = array<i64: 8, 32>}]} {
    %c0 = arith.constant 0 : index
    %c0_0 = arith.constant 0 : index
    %0 = vector.load %arg1[%c0, %c0_0] : memref<8x32xf32, #tpu.memory_space<vmem>>, vector<8x32xf32>
    %cst = arith.constant dense<0xFF800000> : vector<8xf32>
    %1 = vector.multi_reduction <maximumf>, %0, %cst [1] : vector<8x32xf32> to vector<8xf32>
    %2 = vector.shape_cast %1 : vector<8xf32> to vector<8x1xf32>
    %3 = vector.broadcast %2 : vector<8x1xf32> to vector<8x32xf32>
    %4 = arith.subf %0, %3 : vector<8x32xf32>
    %cst_1 = arith.constant 2.500000e-01 : f32
    %5 = vector.broadcast %cst_1 : f32 to vector<8x32xf32>
    %6 = arith.mulf %4, %5 : vector<8x32xf32>
    %7 = math.exp %6 : vector<8x32xf32>
    %cst_2 = arith.constant dense<0.000000e+00> : vector<8xf32>
    %8 = vector.multi_reduction <add>, %7, %cst_2 [1] : vector<8x32xf32> to vector<8xf32>
    %9 = vector.shape_cast %8 : vector<8xf32> to vector<8x1xf32>
    %cst_3 = arith.constant 1.000000e+00 : f32
    %10 = vector.broadcast %cst_3 : f32 to vector<8x1xf32>
    %11 = arith.divf %10, %9 : vector<8x1xf32>
    %12 = vector.broadcast %11 : vector<8x1xf32> to vector<8x32xf32>
    %13 = arith.mulf %7, %12 : vector<8x32xf32>
    %c0_4 = arith.constant 0 : index
    %c0_5 = arith.constant 0 : index
    %14 = vector.load %arg2[%c0_4, %c0_5] : memref<8x32xf32, #tpu.memory_space<vmem>>, vector<8x32xf32>
    tpu.vector_store %arg2[%c0_4, %c0_5], %13 {strides = array<i32>} : memref<8x32xf32, #tpu.memory_space<vmem>>, vector<8x32xf32>,
    return
  }
  func.func @transform_0(%arg0: i32) -> (i32, i32) {
    %c0_i32 = arith.constant 0 : i32
    %c0_i32_0 = arith.constant 0 : i32
    return %arg0, %c0_i32 : i32, i32
  }
  func.func @transform_1(%arg0: i32) -> (i32, i32) {
    %c0_i32 = arith.constant 0 : i32
    %c0_i32_0 = arith.constant 0 : i32
    return %arg0, %c0_i32 : i32, i32
  }
}

</mosaic_0001>

<llo_original>
// kernel: tpu_custom_call.1
$region0: #{tpu_custom_call.1}
  #allocation0 [shape = 'u32[]', space=smem, size = 0x4, offset = 0x4, fixed_abs, tag = 'smem constant byte address 0x4 - core index']
  #allocation1 [shape = 'u32[144,128]{1,0:T(1,128)}', space=vmem, size = 0x12000, scoped, tag = 'internal scratch']
  %s0 = inlined_call_operand.hbm [shape: f32[8,32], index: 0, kind: input, shape index: {}]
  %s1 = inlined_call_operand.hbm [shape: f32[8,32], index: 1, kind: output, shape index: {}]
  %s2 = sld [smem:[#allocation0]]
  $region18: #{tpu_custom_call.1} parent=0
    _
  %s4 = ssub.s32 1, %s2
  %s5 = scalar_select 0, %s4, %s2
  $region1: #{tpu_custom_call.1} parent=0
    #allocation2 [shape = 'u8[4096]{0}', space=vmem, size = 0x1000, scoped, tag = 'input window, operand 0, single buffered']
    #allocation3 [shape = 's32[1]{0}', space=sflag, size = 0x4, scoped, tag = 'scoped memory for tpu_custom_call.1']
    #allocation4 [shape = 's32[1]{0}', space=sflag, size = 0x4, scoped, tag = 'scoped memory for tpu_custom_call.1']
    #allocation5 [shape = 'u8[4096]{0}', space=vmem, size = 0x1000, scoped, tag = 'output window, operand 0, single buffered']
    %6 = vsyncpa [#allocation3], 0
    %7 = vsyncpa [#allocation4], 0
    // Predicated region
    $region2: #{tpu_custom_call.1} parent=1 // pred_check
      _
    $region3: #{tpu_custom_call.1} parent=1 // pred_check_branch
      %9 = sbr.rel (0) target = $region5
    $region4: #{tpu_custom_call.1} parent=1 // pred_region
      %s11 = ssub.s32 128, 128
      %12 = vsyncadd [#allocation3], %s11
      %s14 = sshll.u32 [#allocation2], 4
      %s15 = int_to_ptr.vmem [resolvable:$true] %s14
      %17 = dma.hbm_to_vmem [thread:$0]  %s0, 128, %s15, [#allocation3]
    $region5: #{tpu_custom_call.1} parent=1 // pred_fallthru
      _
    // Predicated region
    $region6: #{tpu_custom_call.1} parent=1 // pred_check
      _
    $region7: #{tpu_custom_call.1} parent=1 // pred_check_branch
      %19 = sbr.rel (0) target = $region9
    $region8: #{tpu_custom_call.1} parent=1 // pred_region
      %20 = dma.done [#allocation3], 128
    $region9: #{tpu_custom_call.1} parent=1 // pred_fallthru
      _
    %v21 = vld [vmem:[#allocation2] sm:$0xff]
    %vm22 = vcmask 261120
    %v23 = vsel %vm22, %v21, -inf
    %24 = vmax.xlane.f32.xlu0 %v23
    %v25 = vpop.xlane.xlu0 %24
    %v26 = vsub.f32 %v21, %v25
    %v27 = vmul.f32 %v26, 0.25
    %v28 = vmul.f32 %v27, 1.442695
    %v29 = vpow.pop %v28
    %v30 = vsel %vm22, %v29, 0.0
    %31 = vadd.xlane.f32.xlu0 %v30
    %v32 = vpop.xlane.xlu0 %31
    %v33 = vrcp.pop %v32
    %v34 = vmul.f32 1.0, %v33
    %v35 = vmul.f32 %v29, %v34
    %36 = vst.msk [vmem:[#allocation5] sm:$0xff] %vm22, %v35
    // Predicated region
    $region10: #{tpu_custom_call.1} parent=1 // pred_check
      _
    $region11: #{tpu_custom_call.1} parent=1 // pred_check_branch
      %38 = sbr.rel (0) target = $region13
    $region12: #{tpu_custom_call.1} parent=1 // pred_region
      %s40 = ssub.s32 128, 128
      %41 = vsyncadd [#allocation4], %s40
      %s43 = sshll.u32 [#allocation5], 4
      %s44 = int_to_ptr.vmem [resolvable:$true] %s43
      %46 = dma.vmem_to_hbm [thread:$0]  %s44, 128, %s1, [#allocation4]
    $region13: #{tpu_custom_call.1} parent=1 // pred_fallthru
      _
    // Predicated region
    $region14: #{tpu_custom_call.1} parent=1 // pred_check
      _
    $region15: #{tpu_custom_call.1} parent=1 // pred_check_branch
      %48 = sbr.rel (0) target = $region17
    $region16: #{tpu_custom_call.1} parent=1 // pred_region
      %49 = dma.done [#allocation4], 128
    $region17: #{tpu_custom_call.1} parent=1 // pred_fallthru
      _
    %50 = vsyncpa [#allocation3], 1
    %51 = vsyncpa [#allocation4], 1

</llo_original>
